<compile_context>
chip_gen: v7x
topology: tpu7x:2x2x1
jax: 0.10.0
libtpu: 0.0.40
codegen_flags: <defaults>
</compile_context>

<pallas_src>
import functools

import jax
import jax.numpy as jnp
from jax.experimental import pallas as pl
from jax.experimental.pallas import tpu as pltpu

V_TH = 1.0  # IFNode default v_threshold; v_reset = 0.0 (hard reset)


# ------------------------------ small helpers ------------------------------

def _round_up(x, m):
    return ((x + m - 1) // m) * m


def _rows_tiling(n, target=512, min_tile=128):
    """Pick (padded_rows, row_tile): row_tile % 8 == 0, padded_rows % row_tile == 0,
    row_tile <= target.  Never falls back to one giant block (VMEM hazard on v7x's
    64 MiB) nor to tiny tiles; prefers >= 2 row blocks so both v7x TensorCores get
    work on small problems.  Padding is bounded and the padded rows are sliced off."""
    n8 = _round_up(max(n, 8), 8)
    if n8 <= target:
        half = n8 // 2
        if half >= 8 and half % 8 == 0:
            return n8, half
        return n8, n8
    for t in range(target, min_tile - 1, -8):
        if n8 % t == 0:
            return n8, t
    return _round_up(n, 256), 256   # awkward n: bounded zero-pad instead of tiny tiles


def fold_bn(w, gamma, beta, mean, var, eps=1e-5):
    """Fold inference-mode BatchNorm into conv weights. w's last axis = Cout."""
    scale = gamma / jnp.sqrt(var + eps)
    return w * scale, beta - mean * scale


def _pad2(w, rows, cols):
    out = jnp.zeros((rows, cols), w.dtype)
    return out.at[: w.shape[0], : w.shape[1]].set(w)


def _pad_bias(b, cols):
    out = jnp.zeros((1, cols), jnp.float32)
    return out.at[0, : b.shape[0]].set(b)


def _if_rate_const(h, T):
    """Firing rate of an IF neuron (hard reset, v_th=1) fed the constant input h for
    T steps.  Fully in-register; mask + where form keeps the VALU epilogue minimal
    (charge-add, cmp, select, cast, acc-add per step)."""
    def step(_, carry):
        v, acc = carry
        v = v + h
        spike = v >= V_TH
        return jnp.where(spike, 0.0, v), acc + spike.astype(jnp.float32)

    z = jnp.zeros_like(h)
    _, acc = jax.lax.fori_loop(0, T, step, (z, z), unroll=True)
    return acc * (1.0 / T)


# ----------------------------- Pallas kernels -----------------------------

def _if_rate_mean_kernel(x_ref, r_ref, m_ref, v_ref, c_ref):
    """Multi-step IF over the (innermost) T grid axis, fused with the identity mean.
    Spike count + membrane accumulate in f32 VMEM scratch (exact for any T); the mean
    accumulates directly in the resident f32 output block; the rate is written once
    (bf16, lane-dense) at the final step."""
    t = pl.program_id(1)
    nt = pl.num_programs(1)

    @pl.when(t == 0)
    def _():
        v_ref[...] = jnp.zeros_like(v_ref)
        c_ref[...] = jnp.zeros_like(c_ref)
        m_ref[...] = jnp.zeros_like(m_ref)

    x = x_ref[...]                           # f32 elementwise (VPU)
    v = v_ref[...] + x                       # neuronal_charge
    spike = v >= V_TH                        # fire (heaviside forward)
    v_ref[...] = jnp.where(spike, 0.0, v)    # hard reset to 0
    c_ref[...] = c_ref[...] + spike.astype(jnp.float32)
    m_ref[...] = m_ref[...] + x

    @pl.when(t == nt - 1)
    def _():
        inv_t = 1.0 / nt
        r_ref[...] = (c_ref[...] * inv_t).astype(r_ref.dtype)
        m_ref[...] = m_ref[...] * inv_t


def if_rate_and_mean(x_trc, tile_r):
    """x: [T, R, 128] f32 (raw flattened layout) ->
       (sn1 firing rate [R, 128] bf16, mean over T [R, 128] f32)."""
    T, R, C = x_trc.shape
    return pl.pallas_call(
        _if_rate_mean_kernel,
        out_shape=(jax.ShapeDtypeStruct((R, C), jnp.bfloat16),
                   jax.ShapeDtypeStruct((R, C), jnp.float32)),
        grid=(R // tile_r, T),
        in_specs=[pl.BlockSpec((None, tile_r, C), lambda r, t: (t, r, 0))],
        out_specs=(pl.BlockSpec((tile_r, C), lambda r, t: (r, 0)),
                   pl.BlockSpec((tile_r, C), lambda r, t: (r, 0))),
        scratch_shapes=[pltpu.VMEM((tile_r, C), jnp.float32),
                        pltpu.VMEM((tile_r, C), jnp.float32)],
        compiler_params=pltpu.CompilerParams(
            dimension_semantics=("parallel", "arbitrary")),
    )(x_trc)


def _conv1x1_if_kernel(T, x_ref, w_ref, b_ref, o_ref):
    """1x1 conv + folded BN (bf16 MXU matmul) + constant-input IF-rate epilogue."""
    h = jnp.dot(x_ref[...], w_ref[...],
                preferred_element_type=jnp.float32) + b_ref[...]
    o_ref[...] = _if_rate_const(h, T).astype(o_ref.dtype)


def conv1x1_if_rate(x, w, b, T, tile_m):
    """x: [M, Cin] bf16, w: [Cin, Cout] bf16, b: [1, Cout] f32 -> IF rate [M, Cout] bf16."""
    M, Cin = x.shape
    Cout = w.shape[1]
    return pl.pallas_call(
        functools.partial(_conv1x1_if_kernel, T),
        out_shape=jax.ShapeDtypeStruct((M, Cout), jnp.bfloat16),
        grid=(M // tile_m,),
        in_specs=[pl.BlockSpec((tile_m, Cin), lambda m: (m, 0)),
                  pl.BlockSpec((Cin, Cout), lambda m: (0, 0)),
                  pl.BlockSpec((1, Cout), lambda m: (0, 0))],
        out_specs=pl.BlockSpec((tile_m, Cout), lambda m: (m, 0)),
        compiler_params=pltpu.CompilerParams(dimension_semantics=("parallel",)),
    )(x, w, b)


def _conv3x3_if_res_kernel(T, H, W, xp_ref, w2_ref, b2_ref, w3_ref, b3_ref,
                           res_ref, o_ref):
    """Fused per-image block:
       conv2 (3x3, pad=1) + BN  -> built as 9 accumulated tap-dots (no im2col concat,
                                   only ONE halo slice live at a time)
       sn3 constant-input IF rate (in-register)
       conv3 (1x1) + BN + identity-mean residual add, single f32 frame write.
    xp_ref: [H+2, W+2, Cin] (spatially padded image), w2_ref: [9*Cin, Cmid],
    w3_ref: [Cmid, Cout], res_ref/o_ref: [H*W, Cout]."""
    cin = xp_ref.shape[-1]
    h = None
    for kh in range(3):
        for kw in range(3):
            xs = xp_ref[kh:kh + H, kw:kw + W, :].reshape(H * W, cin)
            k0 = (kh * 3 + kw) * cin
            d = jnp.dot(xs, w2_ref[k0:k0 + cin, :],
                        preferred_element_type=jnp.float32)
            h = d if h is None else h + d
    h = h + b2_ref[...]
    r3 = _if_rate_const(h, T).astype(jnp.bfloat16)
    out = jnp.dot(r3, w3_ref[...], preferred_element_type=jnp.float32)
    o_ref[...] = out + b3_ref[...] + res_ref[...]


def conv3x3_if_res(xp, w2, b2, w3, b3, res, T, H, W):
    """xp: [N, H+2, W+2, Cin] bf16, w2: [9*Cin, Cmid] bf16, w3: [Cmid, Cout] bf16,
    b2/b3: [1, *] f32, res: [N, H*W, Cout] f32 -> final frame [N, H*W, Cout] f32."""
    N = xp.shape[0]
    Cin = xp.shape[-1]
    Cmid = w2.shape[-1]
    Cout = w3.shape[-1]
    return pl.pallas_call(
        functools.partial(_conv3x3_if_res_kernel, T, H, W),
        out_shape=jax.ShapeDtypeStruct((N, H * W, Cout), jnp.float32),
        grid=(N,),
        in_specs=[pl.BlockSpec((None, H + 2, W + 2, Cin), lambda n: (n, 0, 0, 0)),
                  pl.BlockSpec((9 * Cin, Cmid), lambda n: (0, 0)),
                  pl.BlockSpec((1, Cmid), lambda n: (0, 0)),
                  pl.BlockSpec((Cmid, Cout), lambda n: (0, 0)),
                  pl.BlockSpec((1, Cout), lambda n: (0, 0)),
                  pl.BlockSpec((None, H * W, Cout), lambda n: (n, 0, 0))],
        out_specs=pl.BlockSpec((None, H * W, Cout), lambda n: (n, 0, 0)),
        compiler_params=pltpu.CompilerParams(dimension_semantics=("parallel",)),
    )(xp, w2, b2, w3, b3, res)


# ------------------------------ glue / module ------------------------------

class BottleneckQS:
    expansion = 4

    def __init__(self, key, inplanes, planes, stride=1, groups=1,
                 base_width=64, dilation=1, T_c=None):
        assert stride == 1 and groups == 1 and dilation == 1
        width = int(planes * (base_width / 64.0)) * groups
        out_ch = planes * self.expansion
        # downsample=None identity add requires matching channels
        assert inplanes == out_ch
        self.inplanes, self.width, self.out_ch, self.T_c = inplanes, width, out_ch, T_c

        # lane-dense padded channel sizes (multiples of 128; keep at 128 granularity —
        # wider padding only multiplies real FLOPs/bytes, esp. on v5e's 4x128^2 MXU)
        self.cin_p = _round_up(inplanes, 128)
        self.w_p = _round_up(width, 128)
        self.cout_p = _round_up(out_ch, 128)

        ks = jax.random.split(key, 6)

        def bn_params(k, c):
            k1, k2, k3, k4 = jax.random.split(k, 4)
            gamma = 1.0 + 0.1 * jax.random.normal(k1, (c,), jnp.float32)
            beta = 0.1 * jax.random.normal(k2, (c,), jnp.float32)
            mean = 0.1 * jax.random.normal(k3, (c,), jnp.float32)
            var = 1.0 + 0.1 * jnp.abs(jax.random.normal(k4, (c,), jnp.float32))
            return gamma, beta, mean, var

        # conv weights channels-last: [Cin, Cout] / [3, 3, Cin, Cout]
        w1 = 0.1 * jax.random.normal(ks[0], (inplanes, width), jnp.float32)
        w2 = 0.1 * jax.random.normal(ks[1], (3, 3, width, width), jnp.float32)
        w3 = 0.1 * jax.random.normal(ks[2], (width, out_ch), jnp.float32)
        w1, b1 = fold_bn(w1, *bn_params(ks[3], width))
        w2, b2 = fold_bn(w2, *bn_params(ks[4], width))
        w3, b3 = fold_bn(w3, *bn_params(ks[5], out_ch))

        # zero-pad to lane-dense shapes; matmul operands in bf16, biases in f32
        self.w1 = _pad2(w1, self.cin_p, self.w_p).astype(jnp.bfloat16)
        self.b1 = _pad_bias(b1, self.w_p)
        w2p = jnp.zeros((3, 3, self.w_p, self.w_p), jnp.float32)
        w2p = w2p.at[:, :, :width, :width].set(w2)
        self.w2 = w2p.reshape(9 * self.w_p, self.w_p).astype(jnp.bfloat16)
        self.b2 = _pad_bias(b2, self.w_p)
        self.w3 = _pad2(w3, self.w_p, self.cout_p).astype(jnp.bfloat16)
        self.b3 = _pad_bias(b3, self.cout_p)

    def __call__(self, x):
        # x: [T, N, C, H, W]  (PyTorch layout)
        T, N, C, H, W = x.shape
        assert C == self.inplanes
        Tm = int(self.T_c) if self.T_c else T

        # ---- kernel 1: sn1 firing rate + identity mean, ONE streaming pass over x
        # in its raw flattened layout (no transpose / channel-pad of the T-stacked
        # tensor: it inflated HBM reads of the dominant mem-bound pass by cin_p/C).
        L = N * C * H * W
        R = -(-L // 128)
        Rp, tile_r = _rows_tiling(R)
        Lp = Rp * 128
        x_flat = x.reshape(T, L)
        if Lp != L:
            x_flat = jnp.pad(x_flat, ((0, 0), (0, Lp - L)))
        x_trc = x_flat.reshape(T, Rp, 128)

        r_flat, m_flat = if_rate_and_mean(x_trc, tile_r)     # [Rp,128] bf16 / f32

        # single-frame reshapes/transposes/pads only (cheap vs the T-stacked pass)
        r_frame = r_flat.reshape(Lp)[:L].reshape(N, C, H, W)
        m_frame = m_flat.reshape(Lp)[:L].reshape(N, C, H, W)

        M = N * H * W
        Mp, tile_m = _rows_tiling(M)

        r1 = jnp.transpose(r_frame, (0, 2, 3, 1))            # NHWC, bf16
        r1 = jnp.pad(r1, ((0, 0), (0, 0), (0, 0), (0, self.cin_p - C)))
        r1 = r1.reshape(M, self.cin_p)
        if Mp != M:
            r1 = jnp.pad(r1, ((0, Mp - M), (0, 0)))

        xmean = jnp.transpose(m_frame, (0, 2, 3, 1))          # NHWC, f32
        xmean = jnp.pad(xmean, ((0, 0), (0, 0), (0, 0), (0, self.cout_p - C)))
        xmean = xmean.reshape(N, H * W, self.cout_p)

        # ---- kernel 2: conv1 + BN, fused sn2 (constant-input IF over Tm)
        r2 = conv1x1_if_rate(r1, self.w1, self.b1, Tm, tile_m)   # [Mp, w_p] bf16
        r2 = r2[:M].reshape(N, H, W, self.w_p)
        r2_pad = jnp.pad(r2, ((0, 0), (1, 1), (1, 1), (0, 0)))   # spatial halo
        # TODO(synk): emit the halo directly from conv1's out_spec (offset index_map
        #             into a pre-zeroed padded buffer) to skip this extra bf16 pass.

        # ---- kernel 3: conv2(3x3)+BN + sn3 + conv3+BN + identity-mean residual, fused
        out_frame = conv3x3_if_res(r2_pad, self.w2, self.b2, self.w3, self.b3,
                                   xmean, Tm, H, W)           # [N, H*W, cout_p] f32

        # slice off channel padding, NHWC -> NCHW on the single frame, then broadcast
        # lazily over T (the reference output is constant over T).
        out_nchw = (out_frame.reshape(N, H, W, self.cout_p)[..., : self.out_ch]
                    .transpose(0, 3, 1, 2))
        return jnp.broadcast_to(out_nchw[None], (Tm, N, self.out_ch, H, W))


if __name__ == "__main__":
    key = jax.random.PRNGKey(0)
    k_x, k_p = jax.random.split(key)

    T, N, planes, H, W = 4, 2, 4, 8, 8
    inplanes = planes * BottleneckQS.expansion   # identity path requires Cin == Cout
    x = jax.random.normal(k_x, (T, N, inplanes, H, W), jnp.float32)

    block = BottleneckQS(k_p, inplanes, planes)
    out = jax.block_until_ready(block(x))
    assert out.shape == (T, N, planes * 4, H, W)
    assert bool(jnp.all(jnp.isfinite(out)))
    print("KERNEL_OK")
</pallas_src>

<mosaic_0001>
module attributes {stable_mosaic.version = 11 : i64} {
  func.func @_if_rate_mean_kernel(%arg0: i32, %arg1: i32, %arg2: memref<1x8x128xf32, #tpu.memory_space<vmem>>, %arg3: memref<8x128xbf16, #tpu.memory_space<vmem>>, %arg4: memref<8x128xf32, #tpu.memory_space<vmem>>, %arg5: memref<8x128xf32, #tpu.memory_space<vmem>>, %arg6: memref<8x128xf32, #tpu.memory_space<vmem>>) attributes {dimension_semantics = [#tpu.dimension_semantics<parallel>, #tpu.dimension_semantics<arbitrary>], iteration_bounds = array<i64: 2, 4>, scalar_prefetch = 0 : i64, scratch_operands = 2 : i64, tpu.core_type = #tpu.core_type<tc>, window_params = [{transform_indices = @transform_0, window_bounds = array<i64: 1, 8, 128>}, {transform_indices = @transform_1, window_bounds = array<i64: 8, 128>}, {transform_indices = @transform_2, window_bounds = array<i64: 8, 128>}]} {
    %c0_i32 = arith.constant 0 : i32
    %0 = arith.cmpi eq, %arg1, %c0_i32 : i32
    %1 = arith.extui %0 : i1 to i32
    %c0_i32_0 = arith.constant 0 : i32
    %2 = arith.cmpi ne, %1, %c0_i32_0 : i32
    scf.if %2 {
      %cst_17 = arith.constant 0.000000e+00 : f32
      %23 = vector.broadcast %cst_17 : f32 to vector<8x128xf32>
      %c0_18 = arith.constant 0 : index
      %c0_19 = arith.constant 0 : index
      %24 = vector.load %arg5[%c0_18, %c0_19] : memref<8x128xf32, #tpu.memory_space<vmem>>, vector<8x128xf32>
      tpu.vector_store %arg5[%c0_18, %c0_19], %23 {strides = array<i32>} : memref<8x128xf32, #tpu.memory_space<vmem>>, vector<8x128xf32>,
      %cst_20 = arith.constant 0.000000e+00 : f32
      %25 = vector.broadcast %cst_20 : f32 to vector<8x128xf32>
      %c0_21 = arith.constant 0 : index
      %c0_22 = arith.constant 0 : index
      %26 = vector.load %arg6[%c0_21, %c0_22] : memref<8x128xf32, #tpu.memory_space<vmem>>, vector<8x128xf32>
      tpu.vector_store %arg6[%c0_21, %c0_22], %25 {strides = array<i32>} : memref<8x128xf32, #tpu.memory_space<vmem>>, vector<8x128xf32>,
      %cst_23 = arith.constant 0.000000e+00 : f32
      %27 = vector.broadcast %cst_23 : f32 to vector<8x128xf32>
      %c0_24 = arith.constant 0 : index
      %c0_25 = arith.constant 0 : index
      %28 = vector.load %arg4[%c0_24, %c0_25] : memref<8x128xf32, #tpu.memory_space<vmem>>, vector<8x128xf32>
      tpu.vector_store %arg4[%c0_24, %c0_25], %27 {strides = array<i32>} : memref<8x128xf32, #tpu.memory_space<vmem>>, vector<8x128xf32>,
    } else {
    }
    %c0 = arith.constant 0 : index
    %c0_1 = arith.constant 0 : index
    %c0_2 = arith.constant 0 : index
    %3 = vector.load %arg2[%c0, %c0_1, %c0_2] : memref<1x8x128xf32, #tpu.memory_space<vmem>>, vector<1x8x128xf32>
    %4 = vector.shape_cast %3 : vector<1x8x128xf32> to vector<8x128xf32>
    %c0_3 = arith.constant 0 : index
    %c0_4 = arith.constant 0 : index
    %5 = vector.load %arg5[%c0_3, %c0_4] : memref<8x128xf32, #tpu.memory_space<vmem>>, vector<8x128xf32>
    %6 = arith.addf %5, %4 : vector<8x128xf32>
    %cst = arith.constant 1.000000e+00 : f32
    %7 = vector.broadcast %cst : f32 to vector<8x128xf32>
    %8 = arith.cmpf oge, %6, %7 : vector<8x128xf32>
    %cst_5 = arith.constant 0.000000e+00 : f32
    %9 = vector.broadcast %cst_5 : f32 to vector<8x128xf32>
    %10 = arith.select %8, %9, %6 : vector<8x128xi1>, vector<8x128xf32>
    %c0_6 = arith.constant 0 : index
    %c0_7 = arith.constant 0 : index
    %11 = vector.load %arg5[%c0_6, %c0_7] : memref<8x128xf32, #tpu.memory_space<vmem>>, vector<8x128xf32>
    tpu.vector_store %arg5[%c0_6, %c0_7], %10 {strides = array<i32>} : memref<8x128xf32, #tpu.memory_space<vmem>>, vector<8x128xf32>,
    %c0_8 = arith.constant 0 : index
    %c0_9 = arith.constant 0 : index
    %12 = vector.load %arg6[%c0_8, %c0_9] : memref<8x128xf32, #tpu.memory_space<vmem>>, vector<8x128xf32>
    %13 = arith.extui %8 : vector<8x128xi1> to vector<8x128xi32>
    %14 = arith.sitofp %13 : vector<8x128xi32> to vector<8x128xf32>
    %15 = arith.addf %12, %14 : vector<8x128xf32>
    %c0_10 = arith.constant 0 : index
    %c0_11 = arith.constant 0 : index
    %16 = vector.load %arg6[%c0_10, %c0_11] : memref<8x128xf32, #tpu.memory_space<vmem>>, vector<8x128xf32>
    tpu.vector_store %arg6[%c0_10, %c0_11], %15 {strides = array<i32>} : memref<8x128xf32, #tpu.memory_space<vmem>>, vector<8x128xf32>,
    %c0_12 = arith.constant 0 : index
    %c0_13 = arith.constant 0 : index
    %17 = vector.load %arg4[%c0_12, %c0_13] : memref<8x128xf32, #tpu.memory_space<vmem>>, vector<8x128xf32>
    %18 = arith.addf %17, %4 : vector<8x128xf32>
    %c0_14 = arith.constant 0 : index
    %c0_15 = arith.constant 0 : index
    %19 = vector.load %arg4[%c0_14, %c0_15] : memref<8x128xf32, #tpu.memory_space<vmem>>, vector<8x128xf32>
    tpu.vector_store %arg4[%c0_14, %c0_15], %18 {strides = array<i32>} : memref<8x128xf32, #tpu.memory_space<vmem>>, vector<8x128xf32>,
    %c3_i32 = arith.constant 3 : i32
    %20 = arith.cmpi eq, %arg1, %c3_i32 : i32
    %21 = arith.extui %20 : i1 to i32
    %c0_i32_16 = arith.constant 0 : i32
    %22 = arith.cmpi ne, %21, %c0_i32_16 : i32
    scf.if %22 {
      %c0_17 = arith.constant 0 : index
      %c0_18 = arith.constant 0 : index
      %23 = vector.load %arg6[%c0_17, %c0_18] : memref<8x128xf32, #tpu.memory_space<vmem>>, vector<8x128xf32>
      %cst_19 = arith.constant 2.500000e-01 : f32
      %24 = vector.broadcast %cst_19 : f32 to vector<8x128xf32>
      %25 = arith.mulf %23, %24 : vector<8x128xf32>
      %26 = arith.truncf %25 : vector<8x128xf32> to vector<8x128xbf16>
      %c0_20 = arith.constant 0 : index
      %c0_21 = arith.constant 0 : index
      %27 = vector.load %arg3[%c0_20, %c0_21] : memref<8x128xbf16, #tpu.memory_space<vmem>>, vector<8x128xbf16>
      tpu.vector_store %arg3[%c0_20, %c0_21], %26 {strides = array<i32>} : memref<8x128xbf16, #tpu.memory_space<vmem>>, vector<8x128xbf16>,
      %c0_22 = arith.constant 0 : index
      %c0_23 = arith.constant 0 : index
      %28 = vector.load %arg4[%c0_22, %c0_23] : memref<8x128xf32, #tpu.memory_space<vmem>>, vector<8x128xf32>
      %cst_24 = arith.constant 2.500000e-01 : f32
      %29 = vector.broadcast %cst_24 : f32 to vector<8x128xf32>
      %30 = arith.mulf %28, %29 : vector<8x128xf32>
      %c0_25 = arith.constant 0 : index
      %c0_26 = arith.constant 0 : index
      %31 = vector.load %arg4[%c0_25, %c0_26] : memref<8x128xf32, #tpu.memory_space<vmem>>, vector<8x128xf32>
      tpu.vector_store %arg4[%c0_25, %c0_26], %30 {strides = array<i32>} : memref<8x128xf32, #tpu.memory_space<vmem>>, vector<8x128xf32>,
    } else {
    }
    return
  }
  func.func @transform_0(%arg0: i32, %arg1: i32) -> (i32, i32, i32) {
    %c0_i32 = arith.constant 0 : i32
    %c0_i32_0 = arith.constant 0 : i32
    return %arg1, %arg0, %c0_i32 : i32, i32, i32
  }
  func.func @transform_1(%arg0: i32, %arg1: i32) -> (i32, i32) {
    %c0_i32 = arith.constant 0 : i32
    %c0_i32_0 = arith.constant 0 : i32
    return %arg0, %c0_i32 : i32, i32
  }
  func.func @transform_2(%arg0: i32, %arg1: i32) -> (i32, i32) {
    %c0_i32 = arith.constant 0 : i32
    %c0_i32_0 = arith.constant 0 : i32
    return %arg0, %c0_i32 : i32, i32
  }
}

</mosaic_0001>

<llo_original>
// kernel: tpu_custom_call.1
$region0: #{tpu_custom_call.1}
  #allocation0 [shape = 'u32[]', space=smem, size = 0x4, offset = 0x4, fixed_abs, tag = 'smem constant byte address 0x4 - core index']
  #allocation1 [shape = 'u32[144,128]{1,0:T(1,128)}', space=vmem, size = 0x12000, scoped, tag = 'internal scratch']
  #allocation2 [shape = 'f32[8,128]{1,0:T(8,128)}', space=vmem, size = 0x1000, scoped, tag = 'scratch operand']
  #allocation3 [shape = 'f32[8,128]{1,0:T(8,128)}', space=vmem, size = 0x1000, scoped, tag = 'scratch operand']
  %s0 = inlined_call_operand.hbm [shape: f32[4,16,128], index: 0, kind: input, shape index: {}]
  %s1 = inlined_call_operand.hbm [shape: bf16[16,128], index: 1, kind: output, shape index: {0}]
  %s2 = inlined_call_operand.hbm [shape: f32[16,128], index: 2, kind: output, shape index: {1}]
  %3 = xla_tuple %s1, %s2
  %s4 = sld [smem:[#allocation0]]
  $region57: #{tpu_custom_call.1} parent=0
    _
  %s6 = ssub.s32 1, %s4
  %s7 = scalar_select 0, %s6, %s4
  $region1: #{tpu_custom_call.1} parent=0
    #allocation4 [shape = 'u8[8192]{0}', space=vmem, size = 0x2000, scoped, tag = 'input window, operand 0']
    #allocation5 [shape = 's32[2]{0}', space=sflag, size = 0x8, scoped, tag = 'scoped memory for tpu_custom_call.1']
    #allocation6 [shape = 's32[2]{0}', space=sflag, size = 0x8, scoped, tag = 'scoped memory for tpu_custom_call.1']
    #allocation7 [shape = 'u8[4096]{0}', space=vmem, size = 0x1000, scoped, tag = 'output window, operand 0']
    #allocation8 [shape = 'u8[8192]{0}', space=vmem, size = 0x2000, scoped, tag = 'output window, operand 1']
    #allocation9 [shape = 's32[2]{0}', space=sflag, size = 0x8, scoped, tag = 'scoped memory for tpu_custom_call.1']
    %8 = vsyncpa [#allocation5], 0
    %s9 = scalar_lea.sflag [#allocation5], 1
    %10 = vsyncpa %s9, 0
    %11 = vsyncpa [#allocation6], 0
    %s12 = scalar_lea.sflag [#allocation6], 1
    %13 = vsyncpa %s12, 0
    %14 = vsyncpa [#allocation9], 0
    %s15 = scalar_lea.sflag [#allocation9], 1
    %16 = vsyncpa %s15, 0
    loop: start=0, step=1, limit=10
    $region2: #{tpu_custom_call.1} parent=1 // loop_pre_header
      _
    $region3: #{tpu_custom_call.1} parent=1 // loop_header
      %s18 = sphi 0, %s22
      %p19 = scmp.ge.s32.totalorder %s18, 10
      %s25 = sphi 0, %s37
      %s26 = sphi 0, %s33
      %s27 = sphi 0, %s25
      %s28 = sphi 0, %s26
      %s29 = sphi 0, %s27
      %s30 = sphi 0, %s28
      %s42 = sphi 0, %s44
      %s45 = sphi 0, %s42
      %s46 = sphi 0, %s45
      %s62 = sphi 0, %s46
      %s68 = sphi 0, %s70
      %s71 = sphi 0, %s68
      %s72 = sphi 0, %s71
      %s88 = sphi 0, %s72
      %s94 = sphi 0, %s96
      %s97 = sphi 0, %s94
      %s98 = sphi 0, %s97
      %s114 = sphi 0, %s98
    $region4: #{tpu_custom_call.1} parent=1 // loop_header_branch
      %21 = sbr.rel (%p19) target = $region8
    $region5: #{tpu_custom_call.1} parent=1 // loop_body
      %s23 = ssub.s32 %s18, 1
      %s24 = ssub.s32 %s18, 2
      %s31 = sadd.s32 1, %s26
      %p32 = scmp.ge.s32.totalorder %s31, 4
      %s33 = scalar_select %p32, 0, %s31
      %s34 = sadd.s32 1, %s25
      %s35 = scalar_select %p32, %s34, %s25
      %p36 = scmp.ge.s32.totalorder %s35, 2
      %s37 = scalar_select %p36, 0, %s35
      %s38 = ssub.s32 %s26, %s33
      %s39 = ssub.s32 %s25, %s37
      %s40 = sor.u32 %s38, %s39
      %p41 = scmp.eq.s32.totalorder %s40, 0
      %s43 = sadd.s32 %s42, 1
      %s44 = scalar_select %p41, %s42, %s43
      %p47 = pneg %p41
      %p48 = scmp.eq.s32.totalorder %s18, 7
      %p49 = por %p47, %p48
      %p50 = scmp.ne.s32.totalorder %s42, %s45
      %p51 = scmp.eq.s32.totalorder %s18, 0
      %p52 = por %p50, %p51
      %p53 = scmp.ne.s32.totalorder %s42, %s45
      %p54 = scmp.eq.s32.totalorder %s23, 7
      %p55 = por %p53, %p54
      %p56 = scmp.ne.s32.totalorder %s45, %s46
      %p57 = scmp.eq.s32.totalorder %s23, 0
      %p58 = por %p56, %p57
      %p59 = scmp.ne.s32.totalorder %s45, %s46
      %p60 = scmp.eq.s32.totalorder %s24, 7
      %p61 = por %p59, %p60
      %p63 = scmp.ne.s32.totalorder %s46, %s62
      %p64 = scmp.eq.s32.totalorder %s24, 0
      %p65 = por %p63, %p64
      %s66 = ssub.s32 %s25, %s37
      %p67 = scmp.eq.s32.totalorder %s66, 0
      %s69 = sadd.s32 %s68, 1
      %s70 = scalar_select %p67, %s68, %s69
      %p73 = pneg %p67
      %p74 = scmp.eq.s32.totalorder %s18, 7
      %p75 = por %p73, %p74
      %p76 = scmp.ne.s32.totalorder %s68, %s71
      %p77 = scmp.eq.s32.totalorder %s18, 0
      %p78 = por %p76, %p77
      %p79 = scmp.ne.s32.totalorder %s68, %s71
      %p80 = scmp.eq.s32.totalorder %s23, 7
      %p81 = por %p79, %p80
      %p82 = scmp.ne.s32.totalorder %s71, %s72
      %p83 = scmp.eq.s32.totalorder %s23, 0
      %p84 = por %p82, %p83
      %p85 = scmp.ne.s32.totalorder %s71, %s72
      %p86 = scmp.eq.s32.totalorder %s24, 7
      %p87 = por %p85, %p86
      %p89 = scmp.ne.s32.totalorder %s72, %s88
      %p90 = scmp.eq.s32.totalorder %s24, 0
      %p91 = por %p89, %p90
      %s92 = ssub.s32 %s25, %s37
      %p93 = scmp.eq.s32.totalorder %s92, 0
      %s95 = sadd.s32 %s94, 1
      %s96 = scalar_select %p93, %s94, %s95
      %p99 = pneg %p93
      %p100 = scmp.eq.s32.totalorder %s18, 7
      %p101 = por %p99, %p100
      %p102 = scmp.ne.s32.totalorder %s94, %s97
      %p103 = scmp.eq.s32.totalorder %s18, 0
      %p104 = por %p102, %p103
      %p105 = scmp.ne.s32.totalorder %s94, %s97
      %p106 = scmp.eq.s32.totalorder %s23, 7
      %p107 = por %p105, %p106
      %p108 = scmp.ne.s32.totalorder %s97, %s98
      %p109 = scmp.eq.s32.totalorder %s23, 0
      %p110 = por %p108, %p109
      %p111 = scmp.ne.s32.totalorder %s97, %s98
      %p112 = scmp.eq.s32.totalorder %s24, 7
      %p113 = por %p111, %p112
      %p115 = scmp.ne.s32.totalorder %s98, %s114
      %p116 = scmp.eq.s32.totalorder %s24, 0
      %p117 = por %p115, %p116
      %p118 = scmp.le.s32.totalorder 1, %s18
      %p119 = scmp.lt.s32.totalorder %s18, 9
      %p120 = pnand %p118, %p119
      %p121 = pneg %p120
      // Predicated region
      $region9: #{tpu_custom_call.1} parent=5 // pred_check
        _
      $region10: #{tpu_custom_call.1} parent=5 // pred_check_branch
        %123 = sbr.rel (%p120) target = $region12
      $region11: #{tpu_custom_call.1} parent=5 // pred_region
        %s124 = ssub.s32 %s18, 1
      $region12: #{tpu_custom_call.1} parent=5 // pred_fallthru
        _
      %p125 = scmp.lt.s32.totalorder %s18, 8
      // Predicated region
      $region13: #{tpu_custom_call.1} parent=5 // pred_check
        %p126 = pneg %p125
      $region14: #{tpu_custom_call.1} parent=5 // pred_check_branch
        %128 = sbr.rel (%p126) target = $region16
      $region15: #{tpu_custom_call.1} parent=5 // pred_region
        // Predicated region
        $region17: #{tpu_custom_call.1} parent=15 // pred_check
          %p129 = pneg %p52
        $region18: #{tpu_custom_call.1} parent=15 // pred_check_branch
          %131 = sbr.rel (%p129) target = $region20
        $region19: #{tpu_custom_call.1} parent=15 // pred_region
          %s132 = sand.u32 %s42, 1
          %s133 = scalar_lea.sflag [#allocation5], %s132
          %s134 = sand.u32 %s42, 1
          %s135 = smul.addr %s134, 8
          %s136 = scalar_lea.vmem [#allocation4], %s135
          %s138 = ssub.s32 128, 128
          %139 = vsyncadd %s133, %s138
          %s140 = smul.addr %s26, 2
          %s141 = sadd.s32 %s25, %s140
          %s142 = smul.addr %s141, 128
          %s143 = scalar_lea.hbm %s0, %s142
          %s145 = sshll.u32 %s136, 4
          %s146 = int_to_ptr.vmem [resolvable:$true] %s145
          %148 = dma.hbm_to_vmem [thread:$0]  %s143, 128, %s146, %s133
        $region20: #{tpu_custom_call.1} parent=15 // pred_fallthru
          _
      $region16: #{tpu_custom_call.1} parent=5 // pred_fallthru
        _
      %p149 = scmp.le.s32.totalorder 1, %s18
      %p150 = scmp.lt.s32.totalorder %s18, 9
      %p151 = pnand %p149, %p150
      %p152 = pneg %p151
      // Predicated region
      $region21: #{tpu_custom_call.1} parent=5 // pred_check
        _
      $region22: #{tpu_custom_call.1} parent=5 // pred_check_branch
        %154 = sbr.rel (%p151) target = $region24
      $region23: #{tpu_custom_call.1} parent=5 // pred_region
        %s155 = ssub.s32 %s18, 1
        %s156 = sand.u32 %s45, 1
        %s157 = scalar_lea.sflag [#allocation5], %s156
        %s158 = sand.u32 %s45, 1
        %s159 = smul.addr %s158, 8
        %s160 = scalar_lea.vmem [#allocation4], %s159
        // Predicated region
        $region25: #{tpu_custom_call.1} parent=23 // pred_check
          %p161 = pneg %p58
        $region26: #{tpu_custom_call.1} parent=23 // pred_check_branch
          %163 = sbr.rel (%p161) target = $region28
        $region27: #{tpu_custom_call.1} parent=23 // pred_region
          %164 = dma.done %s157, 128
        $region28: #{tpu_custom_call.1} parent=23 // pred_fallthru
          _
        %s165 = sand.u32 %s45, 1
        %s166 = scalar_lea.sflag [#allocation5], %s165
        %s167 = sand.u32 %s45, 1
        %s168 = smul.addr %s167, 8
        %s169 = scalar_lea.vmem [#allocation4], %s168
        %p170 = pneg %p58
        %p171 = pneg %p55
        %p172 = pneg %p84
        %p173 = pneg %p81
        %s174 = sand.u32 %s71, 1
        %s175 = scalar_lea.sflag [#allocation6], %s174
        %s176 = sand.u32 %s71, 1
        %s177 = smul.addr %s176, 4
        %s178 = scalar_lea.vmem [#allocation7], %s177
        %p179 = pneg %p110
        %p180 = pneg %p107
        %s181 = sand.u32 %s97, 1
        %s182 = scalar_lea.sflag [#allocation9], %s181
        %s183 = sand.u32 %s97, 1
        %s184 = smul.addr %s183, 8
        %s185 = scalar_lea.vmem [#allocation8], %s184
        %p186 = scmp.eq.s32.totalorder %s28, 0
        // Predicated region
        $region29: #{tpu_custom_call.1} parent=23 // pred_check
          %p187 = pneg %p186
        $region30: #{tpu_custom_call.1} parent=23 // pred_check_branch
          %189 = sbr.rel (%p187) target = $region32
        $region31: #{tpu_custom_call.1} parent=23 // pred_region
          %190 = vst [vmem:[#allocation2] sm:$0xff] 0.0
          %191 = vst [vmem:[#allocation3] sm:$0xff] 0.0
          %192 = vst [vmem:[%s185] sm:$0xff] 0.0
        $region32: #{tpu_custom_call.1} parent=23 // pred_fallthru
          _
        %v193 = vld [vmem:[%s160] sm:$0xff]
        %v194 = vld [vmem:[#allocation2] sm:$0xff]
        %v195 = vadd.f32 %v194, %v193
        %vm196 = vcmp.ge.f32.partialorder %v195, 1.0
        %v197 = vsel %vm196, 0.0, %v195
        %198 = vst [vmem:[#allocation2] sm:$0xff] %v197
        %v199 = vld [vmem:[#allocation3] sm:$0xff]
        %v200 = vsel %vm196, 1, 0
        %v201 = vcvt.s32.f32 %v200
        %v202 = vadd.f32 %v199, %v201
        %203 = vst [vmem:[#allocation3] sm:$0xff] %v202
        %v204 = vld [vmem:[%s185] sm:$0xff]
        %v205 = vadd.f32 %v204, %v193
        %206 = vst [vmem:[%s185] sm:$0xff] %v205
        %p207 = scmp.eq.s32.totalorder %s28, 3
        // Predicated region
        $region33: #{tpu_custom_call.1} parent=23 // pred_check
          %p208 = pneg %p207
        $region34: #{tpu_custom_call.1} parent=23 // pred_check_branch
          %210 = sbr.rel (%p208) target = $region36
        $region35: #{tpu_custom_call.1} parent=23 // pred_region
          %v211 = vld [vmem:[#allocation3] sm:$0xff]
          %v212 = vmul.f32 %v211, 0.25
          %v213 = vpack.c.bf16 %v212, %v212
          %214 = vst [vmem:[%s178] sm:$0xf] %v213
          %v215 = vld [vmem:[%s185] sm:$0xff]
          %v216 = vmul.f32 %v215, 0.25
          %217 = vst [vmem:[%s185] sm:$0xff] %v216
        $region36: #{tpu_custom_call.1} parent=23 // pred_fallthru
          _
        %s218 = sand.u32 %s71, 1
        %s219 = scalar_lea.sflag [#allocation6], %s218
        %s220 = sand.u32 %s71, 1
        %s221 = smul.addr %s220, 4
        %s222 = scalar_lea.vmem [#allocation7], %s221
        %s223 = sand.u32 %s97, 1
        %s224 = scalar_lea.sflag [#allocation9], %s223
        %s225 = sand.u32 %s97, 1
        %s226 = smul.addr %s225, 8
        %s227 = scalar_lea.vmem [#allocation8], %s226
        // Predicated region
        $region37: #{tpu_custom_call.1} parent=23 // pred_check
          %p228 = pneg %p81
        $region38: #{tpu_custom_call.1} parent=23 // pred_check_branch
          %230 = sbr.rel (%p228) target = $region40
        $region39: #{tpu_custom_call.1} parent=23 // pred_region
          %s232 = ssub.s32 64, 64
          %233 = vsyncadd %s219, %s232
          %s234 = smul.addr %s27, 64
          %s235 = scalar_lea.hbm %s1, %s234
          %s237 = sshll.u32 %s222, 4
          %s238 = int_to_ptr.vmem [resolvable:$true] %s237
          %240 = dma.vmem_to_hbm [thread:$0]  %s238, 64, %s235, %s219
        $region40: #{tpu_custom_call.1} parent=23 // pred_fallthru
          _
        // Predicated region
        $region41: #{tpu_custom_call.1} parent=23 // pred_check
          %p241 = pneg %p107
        $region42: #{tpu_custom_call.1} parent=23 // pred_check_branch
          %243 = sbr.rel (%p241) target = $region44
        $region43: #{tpu_custom_call.1} parent=23 // pred_region
          %s245 = ssub.s32 128, 128
          %246 = vsyncadd %s224, %s245
          %s247 = smul.addr %s27, 128
          %s248 = scalar_lea.hbm %s2, %s247
          %s250 = sshll.u32 %s227, 4
          %s251 = int_to_ptr.vmem [resolvable:$true] %s250
          %253 = dma.vmem_to_hbm [thread:$0]  %s251, 128, %s248, %s224
        $region44: #{tpu_custom_call.1} parent=23 // pred_fallthru
          _
      $region24: #{tpu_custom_call.1} parent=5 // pred_fallthru
        _
      %p254 = scmp.le.s32.totalorder 2, %s18
      // Predicated region
      $region45: #{tpu_custom_call.1} parent=5 // pred_check
        %p255 = pneg %p254
      $region46: #{tpu_custom_call.1} parent=5 // pred_check_branch
        %257 = sbr.rel (%p255) target = $region48
      $region47: #{tpu_custom_call.1} parent=5 // pred_region
        %s258 = ssub.s32 %s18, 2
        // Predicated region
        $region49: #{tpu_custom_call.1} parent=47 // pred_check
          %p259 = pneg %p87
        $region50: #{tpu_custom_call.1} parent=47 // pred_check_branch
          %261 = sbr.rel (%p259) target = $region52
        $region51: #{tpu_custom_call.1} parent=47 // pred_region
          %s262 = sand.u32 %s72, 1
          %s263 = scalar_lea.sflag [#allocation6], %s262
          %s264 = sand.u32 %s72, 1
          %s265 = smul.addr %s264, 4
          %s266 = scalar_lea.vmem [#allocation7], %s265
          %267 = dma.done %s263, 64
        $region52: #{tpu_custom_call.1} parent=47 // pred_fallthru
          _
        // Predicated region
        $region53: #{tpu_custom_call.1} parent=47 // pred_check
          %p268 = pneg %p113
        $region54: #{tpu_custom_call.1} parent=47 // pred_check_branch
          %270 = sbr.rel (%p268) target = $region56
        $region55: #{tpu_custom_call.1} parent=47 // pred_region
          %s271 = sand.u32 %s98, 1
          %s272 = scalar_lea.sflag [#allocation9], %s271
          %s273 = sand.u32 %s98, 1
          %s274 = smul.addr %s273, 8
          %s275 = scalar_lea.vmem [#allocation8], %s274
          %276 = dma.done %s272, 128
        $region56: #{tpu_custom_call.1} parent=47 // pred_fallthru
          _
      $region48: #{tpu_custom_call.1} parent=5 // pred_fallthru
        _
    $region6: #{tpu_custom_call.1} parent=1 // loop_footer
      %s22 = sadd.s32 1, %s18
    $region7: #{tpu_custom_call.1} parent=1 // loop_footer_branch
      %17 = sbr.rel target = $region3
    $region8: #{tpu_custom_call.1} parent=1 // loop_exit
      _
    %277 = vsyncpa [#allocation5], 1
    %s278 = scalar_lea.sflag [#allocation5], 1
    %279 = vsyncpa %s278, 1
    %280 = vsyncpa [#allocation6], 1
    %s281 = scalar_lea.sflag [#allocation6], 1
    %282 = vsyncpa %s281, 1
    %283 = vsyncpa [#allocation9], 1
    %s284 = scalar_lea.sflag [#allocation9], 1
    %285 = vsyncpa %s284, 1

</llo_original>
